<compile_context>
chip_gen: v7x
topology: tpu7x:2x2x1
jax: 0.10.0
libtpu: 0.0.40
codegen_flags: <defaults>
</compile_context>

<pallas_src>
import functools

import jax
import jax.numpy as jnp
import numpy as np
from jax.experimental import pallas as pl
from jax.experimental.pallas import tpu as pltpu

NEG_SLOPE = 0.01  # nn.LeakyReLU() default


# ----------------------------------------------------------------------------
# Fused kernel: one batch element per grid step.
# ----------------------------------------------------------------------------
def _deconv_block_kernel(xup_ref, mask_ref, wdec_ref, bdec_ref, w1_ref, b1_ref,
                         w2_ref, b2_ref, out_ref, *, K, Wp, S, marg):
    """Strip layout: output pixel (i, j) lives at lane s = i*Wp + j; a valid
    conv over the flattened padded grid reads taps at s + kh*Wp + kw.  Lanes
    with j >= out_W (pad columns) or s >= out_H*Wp (128-alignment pad) carry
    garbage that is zeroed by `mask` before re-use and dropped by the wrapper.

      xup_ref : (1, Cin, Pext)      zero-stuffed+padded deconv input (flat).
      mask_ref: (1, S)              1.0 on valid strip lanes, else 0.0.
      w*_ref  : (Cout, K*K*C)       single stacked weight matrix per conv.
      b*_ref  : (Cout, 1)
      out_ref : (1, 2*Cout, S)      [block output ; deconv output] strips.
    """
    f32 = jnp.float32
    Cout = out_ref.shape[1] // 2
    mask = mask_ref[...]                              # (1, S)

    def conv(xpad, w_ref, b_ref):
        # xpad: (C, >= (K-1)*Wp + (K-1) + S) flattened padded-grid strip.
        # Stack the K*K shifted views along sublanes -> one deep matmul.
        taps = [xpad[:, kh * Wp + kw: kh * Wp + kw + S]
                for kh in range(K) for kw in range(K)]           # K*K x (C, S)
        x_stack = jnp.concatenate(taps, axis=0)                  # (K*K*C, S)
        return jnp.dot(w_ref[...], x_stack,
                       preferred_element_type=f32) + b_ref[...]  # (Cout, S)

    zeros_wing = jnp.zeros((Cout, marg), f32)

    def repad(strip):
        # Re-embed a masked output strip into padded-grid layout, in registers
        # (2*marg + S == (K-1)*Wp + (K-1) + S, exactly what conv() needs).
        return jnp.concatenate([zeros_wing, strip * mask, zeros_wing], axis=1)

    def lrelu(a):
        return jnp.where(a >= 0, a, NEG_SLOPE * a)

    xup = xup_ref[0].astype(f32)                      # (Cin, Pext), zero-padded
    xdec = conv(xup, wdec_ref, bdec_ref)              # ConvTranspose2d strip

    h = lrelu(conv(repad(xdec), w1_ref, b1_ref))
    h = lrelu(conv(repad(h), w2_ref, b2_ref))

    # Single full-height (2*Cout = 8 sublane) store: [block out ; deconv out].
    out_ref[0] = jnp.concatenate([h, xdec], axis=0).astype(out_ref.dtype)


def _fused_deconv_block(xup_flat, mask, wdec, bdec, w1, b1, w2, b2,
                        *, K, Wp, S, marg, out_dtype):
    N, Cin, Pext = xup_flat.shape
    Cout = wdec.shape[0]
    kernel = functools.partial(_deconv_block_kernel, K=K, Wp=Wp, S=S, marg=marg)
    return pl.pallas_call(
        kernel,
        out_shape=jax.ShapeDtypeStruct((N, 2 * Cout, S), out_dtype),
        grid=(N,),
        in_specs=[
            pl.BlockSpec((1, Cin, Pext), lambda n: (n, 0, 0)),
            pl.BlockSpec((1, S), lambda n: (0, 0)),
            pl.BlockSpec(wdec.shape, lambda n: (0, 0)),
            pl.BlockSpec((Cout, 1), lambda n: (0, 0)),
            pl.BlockSpec(w1.shape, lambda n: (0, 0)),
            pl.BlockSpec((Cout, 1), lambda n: (0, 0)),
            pl.BlockSpec(w2.shape, lambda n: (0, 0)),
            pl.BlockSpec((Cout, 1), lambda n: (0, 0)),
        ],
        out_specs=pl.BlockSpec((1, 2 * Cout, S), lambda n: (n, 0, 0)),
        compiler_params=pltpu.CompilerParams(
            dimension_semantics=("parallel",)),
    )(xup_flat, mask, wdec, bdec, w1, b1, w2, b2)


# ----------------------------------------------------------------------------
# Parameters (PyTorch shapes) + one-time kernel-layout preparation.
# ----------------------------------------------------------------------------
def init_params(key, in_dim, out_dim, kernel):
    ks = jax.random.split(key, 6)
    s = 0.1
    return {
        "kernel": kernel,
        "wt": s * jax.random.normal(ks[0], (in_dim, out_dim, kernel, kernel), jnp.float32),
        "bt": s * jax.random.normal(ks[1], (out_dim,), jnp.float32),
        "w1": s * jax.random.normal(ks[2], (out_dim, out_dim, kernel, kernel), jnp.float32),
        "b1": s * jax.random.normal(ks[3], (out_dim,), jnp.float32),
        "w2": s * jax.random.normal(ks[4], (out_dim, out_dim, kernel, kernel), jnp.float32),
        "b2": s * jax.random.normal(ks[5], (out_dim,), jnp.float32),
    }


def prepare_params(params):
    """Flip/transpose the weights ONCE into single (Cout, K*K*C) matrices whose
    column order matches the kernel's tap stacking (tap-major, channel-minor)."""
    K = params["kernel"]
    wt, w1, w2 = params["wt"], params["w1"], params["w2"]
    in_dim, out_dim = wt.shape[0], wt.shape[1]
    # ConvTranspose2d == valid conv with spatially flipped, (ci,co)-swapped weight.
    wdec = jnp.flip(wt, axis=(2, 3)).transpose(1, 2, 3, 0).reshape(out_dim, K * K * in_dim)
    wk1 = w1.transpose(0, 2, 3, 1).reshape(out_dim, K * K * out_dim)
    wk2 = w2.transpose(0, 2, 3, 1).reshape(out_dim, K * K * out_dim)
    return {
        "wdec": wdec, "bdec": params["bt"].reshape(out_dim, 1),
        "w1": wk1, "b1": params["b1"].reshape(out_dim, 1),
        "w2": wk2, "b2": params["b2"].reshape(out_dim, 1),
    }


# ----------------------------------------------------------------------------
# DeconvBlock forward (thin JAX glue + one fused Pallas call).
# ----------------------------------------------------------------------------
def _round_up(x, m):
    return (x + m - 1) // m * m


def deconv_block_forward(prepped, x_nchw, add_shape=None):
    Cout = prepped["w1"].shape[0]
    KK = prepped["w1"].shape[1] // Cout
    K = int(round(KK ** 0.5))
    assert K % 2 == 1, "odd kernel assumed (padding = kernel // 2)"
    pad, stride = K // 2, 2
    N, Cin, H_in, W_in = x_nchw.shape

    base_H = (H_in - 1) * stride - 2 * pad + K
    base_W = (W_in - 1) * stride - 2 * pad + K
    if add_shape is not None:
        out_H, out_W = int(add_shape[2]), int(add_shape[3])
    else:
        out_H, out_W = base_H, base_W

    Hp, Wp = out_H + 2 * pad, out_W + 2 * pad   # padded grid (shared by all convs)
    S = _round_up(out_H * Wp, 128)              # 128-aligned lane-dense strip length
    marg = pad * Wp + pad                       # padded-grid offset of pixel (0, 0)
    max_off = (K - 1) * Wp + (K - 1)
    Pext = _round_up(max(Hp * Wp, max_off + S), 128)

    # --- ConvTranspose2d input: zero-stuff (stride 2) + pad, flattened -------
    lp = K - 1 - pad
    xs = jnp.zeros((N, Cin, Hp, Wp), x_nchw.dtype)
    xs = xs.at[:, :, lp:lp + (H_in - 1) * stride + 1:stride,
                     lp:lp + (W_in - 1) * stride + 1:stride].set(x_nchw)
    xup_flat = jnp.pad(xs.reshape(N, Cin, Hp * Wp),
                       ((0, 0), (0, 0), (0, Pext - Hp * Wp)))

    # Valid-pixel mask over strip lanes (row < out_H and col < out_W).
    s_idx = jnp.arange(S, dtype=jnp.int32)
    mask = (((s_idx // Wp) < out_H) & ((s_idx % Wp) < out_W))
    mask = mask.astype(jnp.float32).reshape(1, S)

    strips = _fused_deconv_block(
        xup_flat, mask, prepped["wdec"], prepped["bdec"],
        prepped["w1"], prepped["b1"], prepped["w2"], prepped["b2"],
        K=K, Wp=Wp, S=S, marg=marg, out_dtype=x_nchw.dtype)

    # (N, 2*Cout, S) strips -> drop alignment pad + garbage columns -> NCHW
    out = strips[:, :, :out_H * Wp].reshape(N, 2 * Cout, out_H, Wp)[:, :, :, :out_W]
    if add_shape is None:
        out = out[:, :Cout]
    return out


# ----------------------------------------------------------------------------
# Pure-numpy reference (PyTorch semantics, NCHW) for correctness checking.
# ----------------------------------------------------------------------------
def _np_convT(x, w, b, stride, pad, out_H, out_W):
    N, Cin, H, W = x.shape
    Cout, K = w.shape[1], w.shape[2]
    y = np.zeros((N, Cout, out_H, out_W), np.float32)
    for n in range(N):
        for ci in range(Cin):
            for ih in range(H):
                for iw in range(W):
                    for kh in range(K):
                        for kw in range(K):
                            oh = ih * stride - pad + kh
                            ow = iw * stride - pad + kw
                            if 0 <= oh < out_H and 0 <= ow < out_W:
                                y[n, :, oh, ow] += x[n, ci, ih, iw] * w[ci, :, kh, kw]
    return y + b[None, :, None, None]


def _np_conv(x, w, b, pad):
    N, Cin, H, W = x.shape
    Cout, _, K, _ = w.shape
    xp = np.pad(x, ((0, 0), (0, 0), (pad, pad), (pad, pad)))
    y = np.zeros((N, Cout, H, W), np.float32)
    for kh in range(K):
        for kw in range(K):
            y += np.einsum("nchw,oc->nohw", xp[:, :, kh:kh + H, kw:kw + W], w[:, :, kh, kw])
    return y + b[None, :, None, None]


def ref_forward(params, x, add_shape):
    K = params["kernel"]
    pad = K // 2
    N, Cin, H, W = x.shape
    if add_shape is not None:
        out_H, out_W = int(add_shape[2]), int(add_shape[3])
    else:
        out_H = (H - 1) * 2 - 2 * pad + K
        out_W = (W - 1) * 2 - 2 * pad + K
    lrelu = lambda a: np.where(a >= 0, a, NEG_SLOPE * a)
    xd = _np_convT(x, np.asarray(params["wt"]), np.asarray(params["bt"]), 2, pad, out_H, out_W)
    h = lrelu(_np_conv(xd, np.asarray(params["w1"]), np.asarray(params["b1"]), pad))
    h = lrelu(_np_conv(h, np.asarray(params["w2"]), np.asarray(params["b2"]), pad))
    return h if add_shape is None else np.concatenate([h, xd], axis=1)


if __name__ == "__main__":
    in_dim, out_dim, K = 4, 4, 3
    params = init_params(jax.random.PRNGKey(0), in_dim, out_dim, K)
    prepped = prepare_params(params)

    kx, ka = jax.random.split(jax.random.PRNGKey(0), 2)
    x = jax.random.normal(kx, (2, in_dim, 8, 8), jnp.float32)       # NCHW input
    add = jax.random.normal(ka, (2, out_dim, 16, 16), jnp.float32)  # skip tensor (shape source)

    fwd = jax.jit(deconv_block_forward, static_argnames=("add_shape",))
    out = jax.block_until_ready(fwd(prepped, x, add_shape=add.shape))

    assert out.shape == (2, 2 * out_dim, 16, 16), out.shape
    ref = ref_forward(params, np.asarray(x), add.shape)
    np.testing.assert_allclose(np.asarray(out), ref, rtol=1e-4, atol=1e-4)

    print("KERNEL_OK")
</pallas_src>

<mosaic_0001>
module attributes {stable_mosaic.version = 11 : i64} {
  func.func @_deconv_block_kernel(%arg0: i32, %arg1: memref<1x4x512xf32, #tpu.memory_space<vmem>>, %arg2: memref<1x384xf32, #tpu.memory_space<vmem>>, %arg3: memref<4x36xf32, #tpu.memory_space<vmem>>, %arg4: memref<4x1xf32, #tpu.memory_space<vmem>>, %arg5: memref<4x36xf32, #tpu.memory_space<vmem>>, %arg6: memref<4x1xf32, #tpu.memory_space<vmem>>, %arg7: memref<4x36xf32, #tpu.memory_space<vmem>>, %arg8: memref<4x1xf32, #tpu.memory_space<vmem>>, %arg9: memref<1x8x384xf32, #tpu.memory_space<vmem>>) attributes {dimension_semantics = [#tpu.dimension_semantics<parallel>], iteration_bounds = array<i64: 2>, scalar_prefetch = 0 : i64, scratch_operands = 0 : i64, tpu.core_type = #tpu.core_type<tc>, window_params = [{transform_indices = @transform_0, window_bounds = array<i64: 1, 4, 512>}, {pipeline_mode = #tpu.pipeline_mode<synchronous>, transform_indices = @transform_1, window_bounds = array<i64: 1, 384>}, {pipeline_mode = #tpu.pipeline_mode<synchronous>, transform_indices = @transform_2, window_bounds = array<i64: 4, 36>}, {pipeline_mode = #tpu.pipeline_mode<synchronous>, transform_indices = @transform_3, window_bounds = array<i64: 4, 1>}, {pipeline_mode = #tpu.pipeline_mode<synchronous>, transform_indices = @transform_4, window_bounds = array<i64: 4, 36>}, {pipeline_mode = #tpu.pipeline_mode<synchronous>, transform_indices = @transform_5, window_bounds = array<i64: 4, 1>}, {pipeline_mode = #tpu.pipeline_mode<synchronous>, transform_indices = @transform_6, window_bounds = array<i64: 4, 36>}, {pipeline_mode = #tpu.pipeline_mode<synchronous>, transform_indices = @transform_7, window_bounds = array<i64: 4, 1>}, {transform_indices = @transform_8, window_bounds = array<i64: 1, 8, 384>}]} {
    %c0 = arith.constant 0 : index
    %c0_0 = arith.constant 0 : index
    %0 = vector.load %arg2[%c0, %c0_0] : memref<1x384xf32, #tpu.memory_space<vmem>>, vector<1x384xf32>
    %cst = arith.constant 0.000000e+00 : f32
    %1 = vector.broadcast %cst : f32 to vector<4x19xf32>
    %c0_1 = arith.constant 0 : index
    %c0_2 = arith.constant 0 : index
    %c0_3 = arith.constant 0 : index
    %2 = vector.load %arg1[%c0_1, %c0_2, %c0_3] : memref<1x4x512xf32, #tpu.memory_space<vmem>>, vector<1x4x512xf32>
    %3 = vector.shape_cast %2 : vector<1x4x512xf32> to vector<4x512xf32>
    %4 = vector.extract_strided_slice %3 {offsets = [0, 0], sizes = [4, 384], strides = [1, 1]} : vector<4x512xf32> to vector<4x384xf32>
    %5 = vector.extract_strided_slice %3 {offsets = [0, 1], sizes = [4, 384], strides = [1, 1]} : vector<4x512xf32> to vector<4x384xf32>
    %6 = vector.extract_strided_slice %3 {offsets = [0, 2], sizes = [4, 384], strides = [1, 1]} : vector<4x512xf32> to vector<4x384xf32>
    %7 = vector.extract_strided_slice %3 {offsets = [0, 18], sizes = [4, 384], strides = [1, 1]} : vector<4x512xf32> to vector<4x384xf32>
    %8 = vector.extract_strided_slice %3 {offsets = [0, 19], sizes = [4, 384], strides = [1, 1]} : vector<4x512xf32> to vector<4x384xf32>
    %9 = vector.extract_strided_slice %3 {offsets = [0, 20], sizes = [4, 384], strides = [1, 1]} : vector<4x512xf32> to vector<4x384xf32>
    %10 = vector.extract_strided_slice %3 {offsets = [0, 36], sizes = [4, 384], strides = [1, 1]} : vector<4x512xf32> to vector<4x384xf32>
    %11 = vector.extract_strided_slice %3 {offsets = [0, 37], sizes = [4, 384], strides = [1, 1]} : vector<4x512xf32> to vector<4x384xf32>
    %12 = vector.extract_strided_slice %3 {offsets = [0, 38], sizes = [4, 384], strides = [1, 1]} : vector<4x512xf32> to vector<4x384xf32>
    %13 = tpu.concatenate %4, %5, %6, %7, %8, %9, %10, %11, %12 in 0 : vector<4x384xf32>, vector<4x384xf32>, vector<4x384xf32>, vector<4x384xf32>, vector<4x384xf32>, vector<4x384xf32>, vector<4x384xf32>, vector<4x384xf32>, vector<4x384xf32> -> vector<36x384xf32>
    %c0_4 = arith.constant 0 : index
    %c0_5 = arith.constant 0 : index
    %14 = vector.load %arg3[%c0_4, %c0_5] : memref<4x36xf32, #tpu.memory_space<vmem>>, vector<4x36xf32>
    %cst_6 = arith.constant dense<0.000000e+00> : vector<4x384xf32>
    %15 = tpu.matmul %14, %13, %cst_6 {dimension_numbers = #tpu.dot_dimension_numbers<[1], [0], [0], [1], [0, 0, 1, 1], [], []>} : vector<4x36xf32>, vector<36x384xf32>, vector<4x384xf32> -> vector<4x384xf32>
    %c0_7 = arith.constant 0 : index
    %c0_8 = arith.constant 0 : index
    %16 = vector.load %arg4[%c0_7, %c0_8] : memref<4x1xf32, #tpu.memory_space<vmem>>, vector<4x1xf32>
    %17 = vector.broadcast %16 : vector<4x1xf32> to vector<4x384xf32>
    %18 = arith.addf %15, %17 : vector<4x384xf32>
    %19 = vector.broadcast %0 : vector<1x384xf32> to vector<4x384xf32>
    %20 = arith.mulf %18, %19 : vector<4x384xf32>
    %21 = tpu.concatenate %1, %20, %1 in 1 : vector<4x19xf32>, vector<4x384xf32>, vector<4x19xf32> -> vector<4x422xf32>
    %22 = vector.extract_strided_slice %21 {offsets = [0, 0], sizes = [4, 384], strides = [1, 1]} : vector<4x422xf32> to vector<4x384xf32>
    %23 = vector.extract_strided_slice %21 {offsets = [0, 1], sizes = [4, 384], strides = [1, 1]} : vector<4x422xf32> to vector<4x384xf32>
    %24 = vector.extract_strided_slice %21 {offsets = [0, 2], sizes = [4, 384], strides = [1, 1]} : vector<4x422xf32> to vector<4x384xf32>
    %25 = vector.extract_strided_slice %21 {offsets = [0, 18], sizes = [4, 384], strides = [1, 1]} : vector<4x422xf32> to vector<4x384xf32>
    %26 = vector.extract_strided_slice %21 {offsets = [0, 19], sizes = [4, 384], strides = [1, 1]} : vector<4x422xf32> to vector<4x384xf32>
    %27 = vector.extract_strided_slice %21 {offsets = [0, 20], sizes = [4, 384], strides = [1, 1]} : vector<4x422xf32> to vector<4x384xf32>
    %28 = vector.extract_strided_slice %21 {offsets = [0, 36], sizes = [4, 384], strides = [1, 1]} : vector<4x422xf32> to vector<4x384xf32>
    %29 = vector.extract_strided_slice %21 {offsets = [0, 37], sizes = [4, 384], strides = [1, 1]} : vector<4x422xf32> to vector<4x384xf32>
    %30 = vector.extract_strided_slice %21 {offsets = [0, 38], sizes = [4, 384], strides = [1, 1]} : vector<4x422xf32> to vector<4x384xf32>
    %31 = tpu.concatenate %22, %23, %24, %25, %26, %27, %28, %29, %30 in 0 : vector<4x384xf32>, vector<4x384xf32>, vector<4x384xf32>, vector<4x384xf32>, vector<4x384xf32>, vector<4x384xf32>, vector<4x384xf32>, vector<4x384xf32>, vector<4x384xf32> -> vector<36x384xf32>
    %c0_9 = arith.constant 0 : index
    %c0_10 = arith.constant 0 : index
    %32 = vector.load %arg5[%c0_9, %c0_10] : memref<4x36xf32, #tpu.memory_space<vmem>>, vector<4x36xf32>
    %cst_11 = arith.constant dense<0.000000e+00> : vector<4x384xf32>
    %33 = tpu.matmul %32, %31, %cst_11 {dimension_numbers = #tpu.dot_dimension_numbers<[1], [0], [0], [1], [0, 0, 1, 1], [], []>} : vector<4x36xf32>, vector<36x384xf32>, vector<4x384xf32> -> vector<4x384xf32>
    %c0_12 = arith.constant 0 : index
    %c0_13 = arith.constant 0 : index
    %34 = vector.load %arg6[%c0_12, %c0_13] : memref<4x1xf32, #tpu.memory_space<vmem>>, vector<4x1xf32>
    %35 = vector.broadcast %34 : vector<4x1xf32> to vector<4x384xf32>
    %36 = arith.addf %33, %35 : vector<4x384xf32>
    %cst_14 = arith.constant 0.000000e+00 : f32
    %37 = vector.broadcast %cst_14 : f32 to vector<4x384xf32>
    %38 = arith.cmpf oge, %36, %37 : vector<4x384xf32>
    %cst_15 = arith.constant 0.00999999977 : f32
    %39 = vector.broadcast %cst_15 : f32 to vector<4x384xf32>
    %40 = arith.mulf %39, %36 : vector<4x384xf32>
    %41 = arith.select %38, %36, %40 : vector<4x384xi1>, vector<4x384xf32>
    %42 = vector.broadcast %0 : vector<1x384xf32> to vector<4x384xf32>
    %43 = arith.mulf %41, %42 : vector<4x384xf32>
    %44 = tpu.concatenate %1, %43, %1 in 1 : vector<4x19xf32>, vector<4x384xf32>, vector<4x19xf32> -> vector<4x422xf32>
    %45 = vector.extract_strided_slice %44 {offsets = [0, 0], sizes = [4, 384], strides = [1, 1]} : vector<4x422xf32> to vector<4x384xf32>
    %46 = vector.extract_strided_slice %44 {offsets = [0, 1], sizes = [4, 384], strides = [1, 1]} : vector<4x422xf32> to vector<4x384xf32>
    %47 = vector.extract_strided_slice %44 {offsets = [0, 2], sizes = [4, 384], strides = [1, 1]} : vector<4x422xf32> to vector<4x384xf32>
    %48 = vector.extract_strided_slice %44 {offsets = [0, 18], sizes = [4, 384], strides = [1, 1]} : vector<4x422xf32> to vector<4x384xf32>
    %49 = vector.extract_strided_slice %44 {offsets = [0, 19], sizes = [4, 384], strides = [1, 1]} : vector<4x422xf32> to vector<4x384xf32>
    %50 = vector.extract_strided_slice %44 {offsets = [0, 20], sizes = [4, 384], strides = [1, 1]} : vector<4x422xf32> to vector<4x384xf32>
    %51 = vector.extract_strided_slice %44 {offsets = [0, 36], sizes = [4, 384], strides = [1, 1]} : vector<4x422xf32> to vector<4x384xf32>
    %52 = vector.extract_strided_slice %44 {offsets = [0, 37], sizes = [4, 384], strides = [1, 1]} : vector<4x422xf32> to vector<4x384xf32>
    %53 = vector.extract_strided_slice %44 {offsets = [0, 38], sizes = [4, 384], strides = [1, 1]} : vector<4x422xf32> to vector<4x384xf32>
    %54 = tpu.concatenate %45, %46, %47, %48, %49, %50, %51, %52, %53 in 0 : vector<4x384xf32>, vector<4x384xf32>, vector<4x384xf32>, vector<4x384xf32>, vector<4x384xf32>, vector<4x384xf32>, vector<4x384xf32>, vector<4x384xf32>, vector<4x384xf32> -> vector<36x384xf32>
    %c0_16 = arith.constant 0 : index
    %c0_17 = arith.constant 0 : index
    %55 = vector.load %arg7[%c0_16, %c0_17] : memref<4x36xf32, #tpu.memory_space<vmem>>, vector<4x36xf32>
    %cst_18 = arith.constant dense<0.000000e+00> : vector<4x384xf32>
    %56 = tpu.matmul %55, %54, %cst_18 {dimension_numbers = #tpu.dot_dimension_numbers<[1], [0], [0], [1], [0, 0, 1, 1], [], []>} : vector<4x36xf32>, vector<36x384xf32>, vector<4x384xf32> -> vector<4x384xf32>
    %c0_19 = arith.constant 0 : index
    %c0_20 = arith.constant 0 : index
    %57 = vector.load %arg8[%c0_19, %c0_20] : memref<4x1xf32, #tpu.memory_space<vmem>>, vector<4x1xf32>
    %58 = vector.broadcast %57 : vector<4x1xf32> to vector<4x384xf32>
    %59 = arith.addf %56, %58 : vector<4x384xf32>
    %cst_21 = arith.constant 0.000000e+00 : f32
    %60 = vector.broadcast %cst_21 : f32 to vector<4x384xf32>
    %61 = arith.cmpf oge, %59, %60 : vector<4x384xf32>
    %cst_22 = arith.constant 0.00999999977 : f32
    %62 = vector.broadcast %cst_22 : f32 to vector<4x384xf32>
    %63 = arith.mulf %62, %59 : vector<4x384xf32>
    %64 = arith.select %61, %59, %63 : vector<4x384xi1>, vector<4x384xf32>
    %65 = tpu.concatenate %64, %18 in 0 : vector<4x384xf32>, vector<4x384xf32> -> vector<8x384xf32>
    %c0_23 = arith.constant 0 : index
    %c0_24 = arith.constant 0 : index
    %c0_25 = arith.constant 0 : index
    %66 = vector.load %arg9[%c0_23, %c0_24, %c0_25] : memref<1x8x384xf32, #tpu.memory_space<vmem>>, vector<1x8x384xf32>
    %67 = vector.shape_cast %66 : vector<1x8x384xf32> to vector<8x384xf32>
    %68 = vector.shape_cast %65 : vector<8x384xf32> to vector<1x8x384xf32>
    tpu.vector_store %arg9[%c0_23, %c0_24, %c0_25], %68 {strides = array<i32>} : memref<1x8x384xf32, #tpu.memory_space<vmem>>, vector<1x8x384xf32>,
    return
  }
  func.func @transform_0(%arg0: i32) -> (i32, i32, i32) {
    %c0_i32 = arith.constant 0 : i32
    %c0_i32_0 = arith.constant 0 : i32
    %c0_i32_1 = arith.constant 0 : i32
    return %arg0, %c0_i32, %c0_i32_0 : i32, i32, i32
  }
  func.func @transform_1(%arg0: i32) -> (i32, i32) {
    %c0_i32 = arith.constant 0 : i32
    %c0_i32_0 = arith.constant 0 : i32
    %c0_i32_1 = arith.constant 0 : i32
    return %c0_i32, %c0_i32_0 : i32, i32
  }
  func.func @transform_2(%arg0: i32) -> (i32, i32) {
    %c0_i32 = arith.constant 0 : i32
    %c0_i32_0 = arith.constant 0 : i32
    %c0_i32_1 = arith.constant 0 : i32
    return %c0_i32, %c0_i32_0 : i32, i32
  }
  func.func @transform_3(%arg0: i32) -> (i32, i32) {
    %c0_i32 = arith.constant 0 : i32
    %c0_i32_0 = arith.constant 0 : i32
    %c0_i32_1 = arith.constant 0 : i32
    return %c0_i32, %c0_i32_0 : i32, i32
  }
  func.func @transform_4(%arg0: i32) -> (i32, i32) {
    %c0_i32 = arith.constant 0 : i32
    %c0_i32_0 = arith.constant 0 : i32
    %c0_i32_1 = arith.constant 0 : i32
    return %c0_i32, %c0_i32_0 : i32, i32
  }
  func.func @transform_5(%arg0: i32) -> (i32, i32) {
    %c0_i32 = arith.constant 0 : i32
    %c0_i32_0 = arith.constant 0 : i32
    %c0_i32_1 = arith.constant 0 : i32
    return %c0_i32, %c0_i32_0 : i32, i32
  }
  func.func @transform_6(%arg0: i32) -> (i32, i32) {
    %c0_i32 = arith.constant 0 : i32
    %c0_i32_0 = arith.constant 0 : i32
    %c0_i32_1 = arith.constant 0 : i32
    return %c0_i32, %c0_i32_0 : i32, i32
  }
  func.func @transform_7(%arg0: i32) -> (i32, i32) {
    %c0_i32 = arith.constant 0 : i32
    %c0_i32_0 = arith.constant 0 : i32
    %c0_i32_1 = arith.constant 0 : i32
    return %c0_i32, %c0_i32_0 : i32, i32
  }
  func.func @transform_8(%arg0: i32) -> (i32, i32, i32) {
    %c0_i32 = arith.constant 0 : i32
    %c0_i32_0 = arith.constant 0 : i32
    %c0_i32_1 = arith.constant 0 : i32
    return %arg0, %c0_i32, %c0_i32_0 : i32, i32, i32
  }
}

</mosaic_0001>

<llo_original>
// kernel: deconv_block_forward.1
$region0: #{deconv_block_forward.1}
  #allocation0 [shape = 'u32[]', space=smem, size = 0x4, offset = 0x4, fixed_abs, tag = 'smem constant byte address 0x4 - core index']
  #allocation1 [shape = 'u32[144,128]{1,0:T(1,128)}', space=vmem, size = 0x12000, scoped, tag = 'internal scratch']
  %s0 = inlined_call_operand.vmem [shape: f32[2,4,512], index: 0, kind: input, shape index: {}]
  %s1 = inlined_call_operand.vmem [shape: f32[1,384], index: 1, kind: input, shape index: {}]
  %s2 = inlined_call_operand.vmem [shape: f32[4,36], index: 2, kind: input, shape index: {}]
  %s3 = inlined_call_operand.vmem [shape: f32[4,1], index: 3, kind: input, shape index: {}]
  %s4 = inlined_call_operand.vmem [shape: f32[4,36], index: 4, kind: input, shape index: {}]
  %s5 = inlined_call_operand.vmem [shape: f32[4,1], index: 5, kind: input, shape index: {}]
  %s6 = inlined_call_operand.vmem [shape: f32[4,36], index: 6, kind: input, shape index: {}]
  %s7 = inlined_call_operand.vmem [shape: f32[4,1], index: 7, kind: input, shape index: {}]
  %s8 = inlined_call_operand.vmem [shape: f32[2,8,384], index: 8, kind: output, shape index: {}]
  %s9 = sld [smem:[#allocation0]]
  $region65: #{deconv_block_forward.1} parent=0
    _
  %s11 = ssub.s32 1, %s9
  %s12 = scalar_select 0, %s11, %s9
  loop: start=0, step=1, limit=4
  $region2: #{deconv_block_forward.1} parent=0 // loop_pre_header
    _
  $region3: #{deconv_block_forward.1} parent=0 // loop_header
    %s14 = sphi 0, %s18
    %p15 = scmp.ge.s32.totalorder %s14, 4
    %s24 = sphi 0, %s26
    %s27 = sphi 0, %s24
    %s28 = sphi 0, %s27
    %s44 = sphi 0, %s28
    %s48 = sphi 0, %s48
    %s50 = sphi 0, %s48
    %s51 = sphi 0, %s50
    %s65 = sphi 0, %s51
    %s69 = sphi 0, %s69
    %s71 = sphi 0, %s69
    %s72 = sphi 0, %s71
    %s86 = sphi 0, %s72
    %s90 = sphi 0, %s90
    %s92 = sphi 0, %s90
    %s93 = sphi 0, %s92
    %s107 = sphi 0, %s93
    %s111 = sphi 0, %s111
    %s113 = sphi 0, %s111
    %s114 = sphi 0, %s113
    %s128 = sphi 0, %s114
    %s132 = sphi 0, %s132
    %s134 = sphi 0, %s132
    %s135 = sphi 0, %s134
    %s149 = sphi 0, %s135
    %s153 = sphi 0, %s153
    %s155 = sphi 0, %s153
    %s156 = sphi 0, %s155
    %s170 = sphi 0, %s156
    %s174 = sphi 0, %s174
    %s176 = sphi 0, %s174
    %s177 = sphi 0, %s176
    %s191 = sphi 0, %s177
    %s197 = sphi 0, %s199
    %s200 = sphi 0, %s197
    %s201 = sphi 0, %s200
    %s217 = sphi 0, %s201
  $region4: #{deconv_block_forward.1} parent=0 // loop_header_branch
    %17 = sbr.rel (%p15) target = $region8
  $region5: #{deconv_block_forward.1} parent=0 // loop_body
    %s19 = ssub.s32 %s14, 1
    %s20 = ssub.s32 %s14, 2
    %s21 = sadd.s32 %s14, 1
    %s22 = ssub.s32 %s14, %s21
    %p23 = scmp.eq.s32.totalorder %s22, 0
    %s25 = sadd.s32 %s24, 1
    %s26 = scalar_select %p23, %s24, %s25
    %p29 = pneg %p23
    %p30 = scmp.eq.s32.totalorder %s14, 1
    %p31 = por %p29, %p30
    %p32 = scmp.ne.s32.totalorder %s24, %s27
    %p33 = scmp.eq.s32.totalorder %s14, 0
    %p34 = por %p32, %p33
    %p35 = scmp.ne.s32.totalorder %s24, %s27
    %p36 = scmp.eq.s32.totalorder %s19, 1
    %p37 = por %p35, %p36
    %p38 = scmp.ne.s32.totalorder %s27, %s28
    %p39 = scmp.eq.s32.totalorder %s19, 0
    %p40 = por %p38, %p39
    %p41 = scmp.ne.s32.totalorder %s27, %s28
    %p42 = scmp.eq.s32.totalorder %s20, 1
    %p43 = por %p41, %p42
    %p45 = scmp.ne.s32.totalorder %s28, %s44
    %p46 = scmp.eq.s32.totalorder %s20, 0
    %p47 = por %p45, %p46
    %s49 = sadd.s32 %s48, 1
    %p52 = scmp.eq.s32.totalorder %s14, 1
    %p53 = scmp.ne.s32.totalorder %s48, %s50
    %p54 = scmp.eq.s32.totalorder %s14, 0
    %p55 = por %p53, %p54
    %p56 = scmp.ne.s32.totalorder %s48, %s50
    %p57 = scmp.eq.s32.totalorder %s19, 1
    %p58 = por %p56, %p57
    %p59 = scmp.ne.s32.totalorder %s50, %s51
    %p60 = scmp.eq.s32.totalorder %s19, 0
    %p61 = por %p59, %p60
    %p62 = scmp.ne.s32.totalorder %s50, %s51
    %p63 = scmp.eq.s32.totalorder %s20, 1
    %p64 = por %p62, %p63
    %p66 = scmp.ne.s32.totalorder %s51, %s65
    %p67 = scmp.eq.s32.totalorder %s20, 0
    %p68 = por %p66, %p67
    %s70 = sadd.s32 %s69, 1
    %p73 = scmp.eq.s32.totalorder %s14, 1
    %p74 = scmp.ne.s32.totalorder %s69, %s71
    %p75 = scmp.eq.s32.totalorder %s14, 0
    %p76 = por %p74, %p75
    %p77 = scmp.ne.s32.totalorder %s69, %s71
    %p78 = scmp.eq.s32.totalorder %s19, 1
    %p79 = por %p77, %p78
    %p80 = scmp.ne.s32.totalorder %s71, %s72
    %p81 = scmp.eq.s32.totalorder %s19, 0
    %p82 = por %p80, %p81
    %p83 = scmp.ne.s32.totalorder %s71, %s72
    %p84 = scmp.eq.s32.totalorder %s20, 1
    %p85 = por %p83, %p84
    %p87 = scmp.ne.s32.totalorder %s72, %s86
    %p88 = scmp.eq.s32.totalorder %s20, 0
    %p89 = por %p87, %p88
    %s91 = sadd.s32 %s90, 1
    %p94 = scmp.eq.s32.totalorder %s14, 1
    %p95 = scmp.ne.s32.totalorder %s90, %s92
    %p96 = scmp.eq.s32.totalorder %s14, 0
    %p97 = por %p95, %p96
    %p98 = scmp.ne.s32.totalorder %s90, %s92
    %p99 = scmp.eq.s32.totalorder %s19, 1
    %p100 = por %p98, %p99
    %p101 = scmp.ne.s32.totalorder %s92, %s93
    %p102 = scmp.eq.s32.totalorder %s19, 0
    %p103 = por %p101, %p102
    %p104 = scmp.ne.s32.totalorder %s92, %s93
    %p105 = scmp.eq.s32.totalorder %s20, 1
    %p106 = por %p104, %p105
    %p108 = scmp.ne.s32.totalorder %s93, %s107
    %p109 = scmp.eq.s32.totalorder %s20, 0
    %p110 = por %p108, %p109
    %s112 = sadd.s32 %s111, 1
    %p115 = scmp.eq.s32.totalorder %s14, 1
    %p116 = scmp.ne.s32.totalorder %s111, %s113
    %p117 = scmp.eq.s32.totalorder %s14, 0
    %p118 = por %p116, %p117
    %p119 = scmp.ne.s32.totalorder %s111, %s113
    %p120 = scmp.eq.s32.totalorder %s19, 1
    %p121 = por %p119, %p120
    %p122 = scmp.ne.s32.totalorder %s113, %s114
    %p123 = scmp.eq.s32.totalorder %s19, 0
    %p124 = por %p122, %p123
    %p125 = scmp.ne.s32.totalorder %s113, %s114
    %p126 = scmp.eq.s32.totalorder %s20, 1
    %p127 = por %p125, %p126
    %p129 = scmp.ne.s32.totalorder %s114, %s128
    %p130 = scmp.eq.s32.totalorder %s20, 0
    %p131 = por %p129, %p130
    %s133 = sadd.s32 %s132, 1
    %p136 = scmp.eq.s32.totalorder %s14, 1
    %p137 = scmp.ne.s32.totalorder %s132, %s134
    %p138 = scmp.eq.s32.totalorder %s14, 0
    %p139 = por %p137, %p138
    %p140 = scmp.ne.s32.totalorder %s132, %s134
    %p141 = scmp.eq.s32.totalorder %s19, 1
    %p142 = por %p140, %p141
    %p143 = scmp.ne.s32.totalorder %s134, %s135
    %p144 = scmp.eq.s32.totalorder %s19, 0
    %p145 = por %p143, %p144
    %p146 = scmp.ne.s32.totalorder %s134, %s135
    %p147 = scmp.eq.s32.totalorder %s20, 1
    %p148 = por %p146, %p147
    %p150 = scmp.ne.s32.totalorder %s135, %s149
    %p151 = scmp.eq.s32.totalorder %s20, 0
    %p152 = por %p150, %p151
    %s154 = sadd.s32 %s153, 1
    %p157 = scmp.eq.s32.totalorder %s14, 1
    %p158 = scmp.ne.s32.totalorder %s153, %s155
    %p159 = scmp.eq.s32.totalorder %s14, 0
    %p160 = por %p158, %p159
    %p161 = scmp.ne.s32.totalorder %s153, %s155
    %p162 = scmp.eq.s32.totalorder %s19, 1
    %p163 = por %p161, %p162
    %p164 = scmp.ne.s32.totalorder %s155, %s156
    %p165 = scmp.eq.s32.totalorder %s19, 0
    %p166 = por %p164, %p165
    %p167 = scmp.ne.s32.totalorder %s155, %s156
    %p168 = scmp.eq.s32.totalorder %s20, 1
    %p169 = por %p167, %p168
    %p171 = scmp.ne.s32.totalorder %s156, %s170
    %p172 = scmp.eq.s32.totalorder %s20, 0
    %p173 = por %p171, %p172
    %s175 = sadd.s32 %s174, 1
    %p178 = scmp.eq.s32.totalorder %s14, 1
    %p179 = scmp.ne.s32.totalorder %s174, %s176
    %p180 = scmp.eq.s32.totalorder %s14, 0
    %p181 = por %p179, %p180
    %p182 = scmp.ne.s32.totalorder %s174, %s176
    %p183 = scmp.eq.s32.totalorder %s19, 1
    %p184 = por %p182, %p183
    %p185 = scmp.ne.s32.totalorder %s176, %s177
    %p186 = scmp.eq.s32.totalorder %s19, 0
    %p187 = por %p185, %p186
    %p188 = scmp.ne.s32.totalorder %s176, %s177
    %p189 = scmp.eq.s32.totalorder %s20, 1
    %p190 = por %p188, %p189
    %p192 = scmp.ne.s32.totalorder %s177, %s191
    %p193 = scmp.eq.s32.totalorder %s20, 0
    %p194 = por %p192, %p193
    %s195 = ssub.s32 %s14, %s21
    %p196 = scmp.eq.s32.totalorder %s195, 0
    %s198 = sadd.s32 %s197, 1
    %s199 = scalar_select %p196, %s197, %s198
    %p202 = pneg %p196
    %p203 = scmp.eq.s32.totalorder %s14, 1
    %p204 = por %p202, %p203
    %p205 = scmp.ne.s32.totalorder %s197, %s200
    %p206 = scmp.eq.s32.totalorder %s14, 0
    %p207 = por %p205, %p206
    %p208 = scmp.ne.s32.totalorder %s197, %s200
    %p209 = scmp.eq.s32.totalorder %s19, 1
    %p210 = por %p208, %p209
    %p211 = scmp.ne.s32.totalorder %s200, %s201
    %p212 = scmp.eq.s32.totalorder %s19, 0
    %p213 = por %p211, %p212
    %p214 = scmp.ne.s32.totalorder %s200, %s201
    %p215 = scmp.eq.s32.totalorder %s20, 1
    %p216 = por %p214, %p215
    %p218 = scmp.ne.s32.totalorder %s201, %s217
    %p219 = scmp.eq.s32.totalorder %s20, 0
    %p220 = por %p218, %p219
    %p221 = scmp.le.s32.totalorder 1, %s14
    %p222 = scmp.lt.s32.totalorder %s14, 3
    %p223 = pnand %p221, %p222
    %p224 = pneg %p223
    // Predicated region
    $region9: #{deconv_block_forward.1} parent=5 // pred_check
      _
    $region10: #{deconv_block_forward.1} parent=5 // pred_check_branch
      %226 = sbr.rel (%p223) target = $region12
    $region11: #{deconv_block_forward.1} parent=5 // pred_region
      %s227 = ssub.s32 %s14, 1
      // Predicated region
      $region13: #{deconv_block_forward.1} parent=11 // pred_check
        %p228 = pneg %p61
      $region14: #{deconv_block_forward.1} parent=11 // pred_check_branch
        %230 = sbr.rel (%p228) target = $region16
      $region15: #{deconv_block_forward.1} parent=11 // pred_region
        _
      $region16: #{deconv_block_forward.1} parent=11 // pred_fallthru
        _
      // Predicated region
      $region17: #{deconv_block_forward.1} parent=11 // pred_check
        %p231 = pneg %p82
      $region18: #{deconv_block_forward.1} parent=11 // pred_check_branch
        %233 = sbr.rel (%p231) target = $region20
      $region19: #{deconv_block_forward.1} parent=11 // pred_region
        _
      $region20: #{deconv_block_forward.1} parent=11 // pred_fallthru
        _
      // Predicated region
      $region21: #{deconv_block_forward.1} parent=11 // pred_check
        %p234 = pneg %p103
      $region22: #{deconv_block_forward.1} parent=11 // pred_check_branch
        %236 = sbr.rel (%p234) target = $region24
      $region23: #{deconv_block_forward.1} parent=11 // pred_region
        _
      $region24: #{deconv_block_forward.1} parent=11 // pred_fallthru
        _
      // Predicated region
      $region25: #{deconv_block_forward.1} parent=11 // pred_check
        %p237 = pneg %p124
      $region26: #{deconv_block_forward.1} parent=11 // pred_check_branch
        %239 = sbr.rel (%p237) target = $region28
      $region27: #{deconv_block_forward.1} parent=11 // pred_region
        _
      $region28: #{deconv_block_forward.1} parent=11 // pred_fallthru
        _
      // Predicated region
      $region29: #{deconv_block_forward.1} parent=11 // pred_check
        %p240 = pneg %p145
      $region30: #{deconv_block_forward.1} parent=11 // pred_check_branch
        %242 = sbr.rel (%p240) target = $region32
      $region31: #{deconv_block_forward.1} parent=11 // pred_region
        _
      $region32: #{deconv_block_forward.1} parent=11 // pred_fallthru
        _
      // Predicated region
      $region33: #{deconv_block_forward.1} parent=11 // pred_check
        %p243 = pneg %p166
      $region34: #{deconv_block_forward.1} parent=11 // pred_check_branch
        %245 = sbr.rel (%p243) target = $region36
      $region35: #{deconv_block_forward.1} parent=11 // pred_region
        _
      $region36: #{deconv_block_forward.1} parent=11 // pred_fallthru
        _
      // Predicated region
      $region37: #{deconv_block_forward.1} parent=11 // pred_check
        %p246 = pneg %p187
      $region38: #{deconv_block_forward.1} parent=11 // pred_check_branch
        %248 = sbr.rel (%p246) target = $region40
      $region39: #{deconv_block_forward.1} parent=11 // pred_region
        _
      $region40: #{deconv_block_forward.1} parent=11 // pred_fallthru
        _
    $region12: #{deconv_block_forward.1} parent=5 // pred_fallthru
      _
    %p249 = scmp.lt.s32.totalorder %s14, 2
    // Predicated region
    $region41: #{deconv_block_forward.1} parent=5 // pred_check
      %p250 = pneg %p249
    $region42: #{deconv_block_forward.1} parent=5 // pred_check_branch
      %252 = sbr.rel (%p250) target = $region44
    $region43: #{deconv_block_forward.1} parent=5 // pred_region
      // Predicated region
      $region45: #{deconv_block_forward.1} parent=43 // pred_check
        %p253 = pneg %p34
      $region46: #{deconv_block_forward.1} parent=43 // pred_check_branch
        %255 = sbr.rel (%p253) target = $region48
      $region47: #{deconv_block_forward.1} parent=43 // pred_region
        %p256 = scmp.lt.s32.totalorder %s14, 1
        %s257 = scalar_select %p256, %s14, 1
        %s258 = smul.addr %s257, 4
        %s259 = smul.addr %s258, 4
        %s260 = scalar_lea.vmem %s0, %s259
      $region48: #{deconv_block_forward.1} parent=43 // pred_fallthru
        _
    $region44: #{deconv_block_forward.1} parent=5 // pred_fallthru
      _
    %p261 = scmp.le.s32.totalorder 1, %s14
    %p262 = scmp.lt.s32.totalorder %s14, 3
    %p263 = pnand %p261, %p262
    %p264 = pneg %p263
    // Predicated region
    $region49: #{deconv_block_forward.1} parent=5 // pred_check
      _
    $region50: #{deconv_block_forward.1} parent=5 // pred_check_branch
      %266 = sbr.rel (%p263) target = $region52
    $region51: #{deconv_block_forward.1} parent=5 // pred_region
      %s267 = ssub.s32 %s14, 1
      %p268 = scmp.lt.s32.totalorder %s19, 1
      %s269 = scalar_select %p268, %s19, 1
      %s270 = smul.addr %s269, 4
      %s271 = smul.addr %s270, 4
      %s272 = scalar_lea.vmem %s0, %s271
      %p273 = pneg %p40
      %p274 = pneg %p37
      %p275 = pneg %p61
      %p276 = pneg %p58
      %p277 = pneg %p82
      %p278 = pneg %p79
      %p279 = pneg %p103
      %p280 = pneg %p100
      %p281 = pneg %p124
      %p282 = pneg %p121
      %p283 = pneg %p145
      %p284 = pneg %p142
      %p285 = pneg %p166
      %p286 = pneg %p163
      %p287 = pneg %p187
      %p288 = pneg %p184
      %p289 = pneg %p213
      %p290 = pneg %p210
      %p291 = scmp.lt.s32.totalorder %s19, 1
      %s292 = scalar_select %p291, %s19, 1
      %s293 = smul.addr %s292, 3
      %s294 = smul.addr %s293, 8
      %s295 = scalar_lea.vmem %s8, %s294
      %p296 = scmp.lt.s32.totalorder %s19, 1
      %s297 = scalar_select %p296, %s19, 1
      %s298 = smul.addr %s297, 4
      %s299 = smul.addr %s298, 4
      %s300 = scalar_lea.vmem %s0, %s299
      %p301 = scmp.lt.s32.totalorder %s19, 1
      %s302 = scalar_select %p301, %s19, 1
      %s303 = smul.addr %s302, 3
      %s304 = smul.addr %s303, 8
      %s305 = scalar_lea.vmem %s8, %s304
      %v306 = vld [vmem:[%s1] sm:$0x7]
      %v307 = vld [vmem:[%s300] sm:$0xff]
      %v308 = vld [vmem:[%s300 + $0x8] sm:$0xff]
      %v311 = vcombine.high %v307, %v307
      %v313 = vcombine.low %v307, %v307
      %v314 = vcombine.low %v308, %v308
      %315 = vrot.lane.b32.xlu0 %v313, 127
      %v316 = vpop.permute.xlu0 %315
      %317 = vrot.lane.b32.xlu0 %v307, 127
      %v318 = vpop.permute.xlu0 %317
      %319 = vrot.lane.b32.xlu0 %v314, 127
      %v320 = vpop.permute.xlu0 %319
      %321 = vrot.lane.b32.xlu0 %v308, 127
      %v322 = vpop.permute.xlu0 %321
      %vm323 = vcmask 1039360
      %v324 = vsel %vm323, %v316, %v318
      %v325 = vsel %vm323, %v318, %v320
      %v326 = vsel %vm323, %v320, %v322
      %v330 = vcombine.high %v308, %v308
      %331 = vrot.lane.b32.xlu0 %v307, 126
      %v332 = vpop.permute.xlu0 %331
      %333 = vrot.lane.b32.xlu0 %v311, 126
      %v334 = vpop.permute.xlu0 %333
      %335 = vrot.lane.b32.xlu0 %v308, 126
      %v336 = vpop.permute.xlu0 %335
      %337 = vrot.lane.b32.xlu0 %v330, 126
      %v338 = vpop.permute.xlu0 %337
      %vm339 = vcmask 1031168
      %v340 = vsel %vm339, %v332, %v334
      %v341 = vsel %vm339, %v334, %v336
      %v342 = vsel %vm339, %v336, %v338
      %346 = vrot.lane.b32.xlu0 %v313, 110
      %v347 = vpop.permute.xlu0 %346
      %348 = vrot.lane.b32.xlu0 %v307, 110
      %v349 = vpop.permute.xlu0 %348
      %350 = vrot.lane.b32.xlu0 %v314, 110
      %v351 = vpop.permute.xlu0 %350
      %352 = vrot.lane.b32.xlu0 %v308, 110
      %v353 = vpop.permute.xlu0 %352
      %vm354 = vcmask 900096
      %v355 = vsel %vm354, %v347, %v349
      %v356 = vsel %vm354, %v349, %v351
      %v357 = vsel %vm354, %v351, %v353
      %361 = vrot.lane.b32.xlu0 %v307, 109
      %v362 = vpop.permute.xlu0 %361
      %363 = vrot.lane.b32.xlu0 %v311, 109
      %v364 = vpop.permute.xlu0 %363
      %365 = vrot.lane.b32.xlu0 %v308, 109
      %v366 = vpop.permute.xlu0 %365
      %367 = vrot.lane.b32.xlu0 %v330, 109
      %v368 = vpop.permute.xlu0 %367
      %vm369 = vcmask 891904
      %v370 = vsel %vm369, %v362, %v364
      %v371 = vsel %vm369, %v364, %v366
      %v372 = vsel %vm369, %v366, %v368
      %376 = vrot.lane.b32.xlu0 %v313, 108
      %v377 = vpop.permute.xlu0 %376
      %378 = vrot.lane.b32.xlu0 %v307, 108
      %v379 = vpop.permute.xlu0 %378
      %380 = vrot.lane.b32.xlu0 %v314, 108
      %v381 = vpop.permute.xlu0 %380
      %382 = vrot.lane.b32.xlu0 %v308, 108
      %v383 = vpop.permute.xlu0 %382
      %vm384 = vcmask 883712
      %v385 = vsel %vm384, %v377, %v379
      %v386 = vsel %vm384, %v379, %v381
      %v387 = vsel %vm384, %v381, %v383
      %391 = vrot.lane.b32.xlu0 %v307, 92
      %v392 = vpop.permute.xlu0 %391
      %393 = vrot.lane.b32.xlu0 %v311, 92
      %v394 = vpop.permute.xlu0 %393
      %395 = vrot.lane.b32.xlu0 %v308, 92
      %v396 = vpop.permute.xlu0 %395
      %397 = vrot.lane.b32.xlu0 %v330, 92
      %v398 = vpop.permute.xlu0 %397
      %vm399 = vcmask 752640
      %v400 = vsel %vm399, %v392, %v394
      %v401 = vsel %vm399, %v394, %v396
      %v402 = vsel %vm399, %v396, %v398
      %406 = vrot.lane.b32.xlu0 %v313, 91
      %v407 = vpop.permute.xlu0 %406
      %408 = vrot.lane.b32.xlu0 %v307, 91
      %v409 = vpop.permute.xlu0 %408
      %410 = vrot.lane.b32.xlu0 %v314, 91
      %v411 = vpop.permute.xlu0 %410
      %412 = vrot.lane.b32.xlu0 %v308, 91
      %v413 = vpop.permute.xlu0 %412
      %vm414 = vcmask 744448
      %v415 = vsel %vm414, %v407, %v409
      %v416 = vsel %vm414, %v409, %v411
      %v417 = vsel %vm414, %v411, %v413
      %421 = vrot.lane.b32.xlu0 %v307, 90
      %v422 = vpop.permute.xlu0 %421
      %423 = vrot.lane.b32.xlu0 %v311, 90
      %v424 = vpop.permute.xlu0 %423
      %425 = vrot.lane.b32.xlu0 %v308, 90
      %v426 = vpop.permute.xlu0 %425
      %427 = vrot.lane.b32.xlu0 %v330, 90
      %v428 = vpop.permute.xlu0 %427
      %vm429 = vcmask 736256
      %v430 = vsel %vm429, %v422, %v424
      %v431 = vsel %vm429, %v424, %v426
      %v432 = vsel %vm429, %v426, %v428
      %vm433 = vcmask 1043456
      %v434 = vsel %vm433, %v307, %v324
      %v435 = vsel %vm433, %v311, %v325
      %v436 = vsel %vm433, %v308, %v326
      %v437 = vsel %vm433, %v340, %v355
      %v438 = vsel %vm433, %v341, %v356
      %v439 = vsel %vm433, %v342, %v357
      %v440 = vsel %vm433, %v370, %v385
      %v441 = vsel %vm433, %v371, %v386
      %v442 = vsel %vm433, %v372, %v387
      %v443 = vsel %vm433, %v400, %v415
      %v444 = vsel %vm433, %v401, %v416
      %v445 = vsel %vm433, %v402, %v417
      %v446 = vld [vmem:[%s2] sm:$0xf]
      %v447 = vld [vmem:[%s3] sm:$0xf]
      %449 = vset.pattern.permute.xlu0 0
      %450 = vperm.xlu0 %449, %v447
      %v451 = vpop.permute.xlu0 %450
      %vm453 = vcmask 293888
      %v455 = vsel %vm453, %v446, 0
      %v457 = vsel %vm433, %v430, 0
      %v459 = vsel %vm433, %v431, 0
      %v461 = vsel %vm433, %v432, 0
      %463 = vmatprep.subr.mxu0 %v435
      %464 = vmatpush1.msra.mxu0 %v434
      %465 = vmatprep.subr.mxu0 %v438
      %466 = vmatpush1.msra.mxu0 %v437
      %467 = vmatprep.subr.mxu0 %v441
      %468 = vmatpush1.msra.mxu0 %v440
      %469 = vmatprep.subr.mxu0 %v444
      %470 = vmatpush1.msra.mxu0 %v443
      %471 = vmatprep.subr.mxu0 %v459
      %472 = vmatpush1.msra.mxu0 %v457
      %473 = vmatprep.subr.mxu0 0.0
      %474 = vmatpush1.msra.mxu0 0.0
      %475 = vmatprep.subr.mxu0 0.0
      %476 = vmatpush1.msra.mxu0 0.0
      %477 = vmatprep.subr.mxu0 0.0
      %478 = vmatpush1.msra.mxu0 0.0
      %479 = vmatprep.subr.mxu0 0.0
      %480 = vmatpush1.msra.mxu0 0.0
      %481 = vmatprep.subr.mxu0 0.0
      %482 = vmatpush1.msra.mxu0 0.0
      %483 = vmatprep.subr.mxu0 0.0
      %484 = vmatpush1.msra.mxu0 0.0
      %485 = vmatprep.subr.mxu0 0.0
      %486 = vmatpush1.msra.mxu0 0.0
      %487 = vmatprep.subr.mxu0 0.0
      %488 = vmatpush1.msra.mxu0 0.0
      %489 = vmatprep.subr.mxu0 0.0
      %490 = vmatpush1.msra.mxu0 0.0
      %491 = vmatprep.subr.mxu0 0.0
      %492 = vmatpush1.msra.mxu0 0.0
      %493 = vmatprep.subr.mxu0 0.0
      %494 = vmatpush1.msra.mxu0 0.0
      %495 = vmatprep.subr.mxu0 0.0
      %496 = vmatpush1.msra.mxu0 0.0
      %497 = vmatprep.subr.mxu0 0.0
      %498 = vmatpush1.msra.mxu0 0.0
      %499 = vmatprep.subr.mxu0 0.0
      %500 = vmatpush1.msra.mxu0 0.0
      %501 = vmatprep.subr.mxu0 0.0
      %502 = vmatpush1.msra.mxu0 0.0
      %503 = vmatprep.subr.mxu0 0.0
      %504 = vmatpush1.msra.mxu0 0.0
      %505 = vmatprep.subr.mxu0 0.0
      %506 = vmatpush1.msra.mxu0 0.0
      %507 = vmatprep.subr.mxu0 0.0
      %508 = vmatpush1.msra.mxu0 0.0
      %509 = vmatprep.subr.mxu0 0.0
      %510 = vmatpush1.msra.mxu0 0.0
      %511 = vmatprep.subr.mxu0 0.0
      %512 = vmatpush1.msra.mxu0 0.0
      %513 = vmatprep.subr.mxu0 0.0
      %514 = vmatpush1.msra.mxu0 0.0
      %515 = vmatprep.subr.mxu0 0.0
      %516 = vmatpush1.msra.mxu0 0.0
      %517 = vmatprep.subr.mxu0 0.0
      %518 = vmatpush1.msra.mxu0 0.0
      %519 = vmatprep.subr.mxu0 0.0
      %520 = vmatpush1.msra.mxu0 0.0
      %521 = vmatprep.subr.mxu0 0.0
      %522 = vmatpush1.msra.mxu0 0.0
      %523 = vmatprep.subr.mxu0 0.0
      %524 = vmatpush1.msra.mxu0 0.0
      %525 = vmatprep.subr.mxu0 0.0
      %526 = vmatpush1.msra.mxu0 0.0
      %527 = vmatprep.mubr.f32.mxu0 0.0
      %528 = vmatmul.mubr.f32.gmra.mrb[0].mxu0 %v455
      %v529 = vpop.f32.mrb[0].mxu0
      %v530 = vadd.f32 %v451, %v529
      %v531 = vpop.f32.mrb[0].mxu0
      %v532 = vadd.f32 %v451, %v531
      %533 = vdwg.mxu0
      %534 = vmatprep.subr.mxu0 0.0
      %535 = vmatpush1.msra.mxu0 %v436
      %536 = vmatprep.subr.mxu0 0.0
      %537 = vmatpush1.msra.mxu0 %v439
      %538 = vmatprep.subr.mxu0 0.0
      %539 = vmatpush1.msra.mxu0 %v442
      %540 = vmatprep.subr.mxu0 0.0
      %541 = vmatpush1.msra.mxu0 %v445
      %542 = vmatprep.subr.mxu0 0.0
      %543 = vmatpush1.msra.mxu0 %v461
      %544 = vmatprep.subr.mxu0 0.0
      %545 = vmatpush1.msra.mxu0 0.0
      %546 = vmatprep.subr.mxu0 0.0
      %547 = vmatpush1.msra.mxu0 0.0
      %548 = vmatprep.subr.mxu0 0.0
      %549 = vmatpush1.msra.mxu0 0.0
      %550 = vmatprep.subr.mxu0 0.0
      %551 = vmatpush1.msra.mxu0 0.0
      %552 = vmatprep.subr.mxu0 0.0
      %553 = vmatpush1.msra.mxu0 0.0
      %554 = vmatprep.subr.mxu0 0.0
      %555 = vmatpush1.msra.mxu0 0.0
      %556 = vmatprep.subr.mxu0 0.0
      %557 = vmatpush1.msra.mxu0 0.0
      %558 = vmatprep.subr.mxu0 0.0
      %559 = vmatpush1.msra.mxu0 0.0
      %560 = vmatprep.subr.mxu0 0.0
      %561 = vmatpush1.msra.mxu0 0.0
      %562 = vmatprep.subr.mxu0 0.0
      %563 = vmatpush1.msra.mxu0 0.0
      %564 = vmatprep.subr.mxu0 0.0
      %565 = vmatpush1.msra.mxu0 0.0
      %566 = vmatprep.subr.mxu0 0.0
      %567 = vmatpush1.msra.mxu0 0.0
      %568 = vmatprep.subr.mxu0 0.0
      %569 = vmatpush1.msra.mxu0 0.0
      %570 = vmatprep.subr.mxu0 0.0
      %571 = vmatpush1.msra.mxu0 0.0
      %572 = vmatprep.subr.mxu0 0.0
      %573 = vmatpush1.msra.mxu0 0.0
      %574 = vmatprep.subr.mxu0 0.0
      %575 = vmatpush1.msra.mxu0 0.0
      %576 = vmatprep.subr.mxu0 0.0
      %577 = vmatpush1.msra.mxu0 0.0
      %578 = vmatprep.subr.mxu0 0.0
      %579 = vmatpush1.msra.mxu0 0.0
      %580 = vmatprep.subr.mxu0 0.0
      %581 = vmatpush1.msra.mxu0 0.0
      %582 = vmatprep.subr.mxu0 0.0
      %583 = vmatpush1.msra.mxu0 0.0
      %584 = vmatprep.subr.mxu0 0.0
      %585 = vmatpush1.msra.mxu0 0.0
      %586 = vmatprep.subr.mxu0 0.0
      %587 = vmatpush1.msra.mxu0 0.0
      %588 = vmatprep.subr.mxu0 0.0
      %589 = vmatpush1.msra.mxu0 0.0
      %590 = vmatprep.subr.mxu0 0.0
      %591 = vmatpush1.msra.mxu0 0.0
      %592 = vmatprep.subr.mxu0 0.0
      %593 = vmatpush1.msra.mxu0 0.0
      %594 = vmatprep.subr.mxu0 0.0
      %595 = vmatpush1.msra.mxu0 0.0
      %596 = vmatprep.subr.mxu0 0.0
      %597 = vmatpush1.msra.mxu0 0.0
      %598 = vmatprep.mubr.f32.mxu0 0.0
      %599 = vmatmul.mubr.f32.gmra.mrb[0].mxu0 %v455
      %v600 = vpop.f32.mrb[0].mxu0
      %v601 = vadd.f32 %v451, %v600
      %v602 = vpop.f32.mrb[0].mxu0
      %603 = vdwg.mxu0
      %v605 = vlaneseq
      %v606 = vshrl.u32 %v605, 7
      %v607 = vsub.s32 0, %v606
      %v608 = vrot.slane %v306, %v607
      %v609 = vlaneseq
      %v610 = vshrl.u32 %v609, 7
      %v611 = vsub.s32 1, %v610
      %v612 = vrot.slane %v306, %v611
      %v613 = vlaneseq
      %v614 = vshrl.u32 %v613, 7
      %v615 = vsub.s32 2, %v614
      %v616 = vrot.slane %v306, %v615
      %v620 = vmul.f32 %v530, %v608
      %v621 = vmul.f32 %v532, %v612
      %v622 = vmul.f32 %v601, %v616
      %626 = vrot.lane.b32.xlu0 %v620, 19
      %v627 = vpop.permute.xlu0 %626
      %628 = vrot.lane.b32.xlu0 %v621, 19
      %v629 = vpop.permute.xlu0 %628
      %630 = vrot.lane.b32.xlu0 %v622, 19
      %v631 = vpop.permute.xlu0 %630
      %vm632 = vcmask 154624
      %v633 = vsel %vm632, %v627, %v629
      %v634 = vsel %vm632, %v629, %v631
      %v639 = vsel %vm632, 0.0, %v627
      %v640 = vsel %vm632, %v631, 0.0
      %v643 = vrot.slane %v639, 4
      %v644 = vrot.slane %v633, 4
      %v645 = vrot.slane %v634, 4
      %v646 = vrot.slane %v640, 4
      %647 = vrot.lane.b32.xlu0 %v643, 127
      %v648 = vpop.permute.xlu0 %647
      %649 = vrot.lane.b32.xlu0 %v644, 127
      %v650 = vpop.permute.xlu0 %649
      %651 = vrot.lane.b32.xlu0 %v645, 127
      %v652 = vpop.permute.xlu0 %651
      %653 = vrot.lane.b32.xlu0 %v646, 127
      %v654 = vpop.permute.xlu0 %653
      %v655 = vsel %vm323, %v648, %v650
      %v656 = vsel %vm323, %v650, %v652
      %v657 = vsel %vm323, %v652, %v654
      %661 = vrot.lane.b32.xlu0 %v639, 126
      %v662 = vpop.permute.xlu0 %661
      %663 = vrot.lane.b32.xlu0 %v633, 126
      %v664 = vpop.permute.xlu0 %663
      %665 = vrot.lane.b32.xlu0 %v634, 126
      %v666 = vpop.permute.xlu0 %665
      %667 = vrot.lane.b32.xlu0 %v640, 126
      %v668 = vpop.permute.xlu0 %667
      %v669 = vsel %vm339, %v662, %v664
      %v670 = vsel %vm339, %v664, %v666
      %v671 = vsel %vm339, %v666, %v668
      %675 = vrot.lane.b32.xlu0 %v643, 110
      %v676 = vpop.permute.xlu0 %675
      %677 = vrot.lane.b32.xlu0 %v644, 110
      %v678 = vpop.permute.xlu0 %677
      %679 = vrot.lane.b32.xlu0 %v645, 110
      %v680 = vpop.permute.xlu0 %679
      %681 = vrot.lane.b32.xlu0 %v646, 110
      %v682 = vpop.permute.xlu0 %681
      %v683 = vsel %vm354, %v676, %v678
      %v684 = vsel %vm354, %v678, %v680
      %v685 = vsel %vm354, %v680, %v682
      %689 = vrot.lane.b32.xlu0 %v639, 109
      %v690 = vpop.permute.xlu0 %689
      %691 = vrot.lane.b32.xlu0 %v633, 109
      %v692 = vpop.permute.xlu0 %691
      %693 = vrot.lane.b32.xlu0 %v634, 109
      %v694 = vpop.permute.xlu0 %693
      %695 = vrot.lane.b32.xlu0 %v640, 109
      %v696 = vpop.permute.xlu0 %695
      %v697 = vsel %vm369, %v690, %v692
      %v698 = vsel %vm369, %v692, %v694
      %v699 = vsel %vm369, %v694, %v696
      %703 = vrot.lane.b32.xlu0 %v643, 108
      %v704 = vpop.permute.xlu0 %703
      %705 = vrot.lane.b32.xlu0 %v644, 108
      %v706 = vpop.permute.xlu0 %705
      %707 = vrot.lane.b32.xlu0 %v645, 108
      %v708 = vpop.permute.xlu0 %707
      %709 = vrot.lane.b32.xlu0 %v646, 108
      %v710 = vpop.permute.xlu0 %709
      %v711 = vsel %vm384, %v704, %v706
      %v712 = vsel %vm384, %v706, %v708
      %v713 = vsel %vm384, %v708, %v710
      %717 = vrot.lane.b32.xlu0 %v639, 92
      %v718 = vpop.permute.xlu0 %717
      %719 = vrot.lane.b32.xlu0 %v633, 92
      %v720 = vpop.permute.xlu0 %719
      %721 = vrot.lane.b32.xlu0 %v634, 92
      %v722 = vpop.permute.xlu0 %721
      %723 = vrot.lane.b32.xlu0 %v640, 92
      %v724 = vpop.permute.xlu0 %723
      %v725 = vsel %vm399, %v718, %v720
      %v726 = vsel %vm399, %v720, %v722
      %v727 = vsel %vm399, %v722, %v724
      %731 = vrot.lane.b32.xlu0 %v643, 91
      %v732 = vpop.permute.xlu0 %731
      %733 = vrot.lane.b32.xlu0 %v644, 91
      %v734 = vpop.permute.xlu0 %733
      %735 = vrot.lane.b32.xlu0 %v645, 91
      %v736 = vpop.permute.xlu0 %735
      %737 = vrot.lane.b32.xlu0 %v646, 91
      %v738 = vpop.permute.xlu0 %737
      %v739 = vsel %vm414, %v732, %v734
      %v740 = vsel %vm414, %v734, %v736
      %v741 = vsel %vm414, %v736, %v738
      %745 = vrot.lane.b32.xlu0 %v639, 90
      %v746 = vpop.permute.xlu0 %745
      %747 = vrot.lane.b32.xlu0 %v633, 90
      %v748 = vpop.permute.xlu0 %747
      %749 = vrot.lane.b32.xlu0 %v634, 90
      %v750 = vpop.permute.xlu0 %749
      %751 = vrot.lane.b32.xlu0 %v640, 90
      %v752 = vpop.permute.xlu0 %751
      %v753 = vsel %vm429, %v746, %v748
      %v754 = vsel %vm429, %v748, %v750
      %v755 = vsel %vm429, %v750, %v752
      %v756 = vsel %vm433, %v639, %v655
      %v757 = vsel %vm433, %v633, %v656
      %v758 = vsel %vm433, %v634, %v657
      %v759 = vsel %vm433, %v669, %v683
      %v760 = vsel %vm433, %v670, %v684
      %v761 = vsel %vm433, %v671, %v685
      %v762 = vsel %vm433, %v697, %v711
      %v763 = vsel %vm433, %v698, %v712
      %v764 = vsel %vm433, %v699, %v713
      %v765 = vsel %vm433, %v725, %v739
      %v766 = vsel %vm433, %v726, %v740
      %v767 = vsel %vm433, %v727, %v741
      %v768 = vld [vmem:[%s4] sm:$0xf]
      %v769 = vld [vmem:[%s5] sm:$0xf]
      %771 = vset.pattern.permute.xlu0 0
      %772 = vperm.xlu0 %771, %v769
      %v773 = vpop.permute.xlu0 %772
      %v776 = vsel %vm453, %v768, 0
      %v778 = vsel %vm433, %v753, 0
      %v780 = vsel %vm433, %v754, 0
      %v782 = vsel %vm433, %v755, 0
      %784 = vmatprep.subr.mxu0 %v757
      %785 = vmatpush1.msra.mxu0 %v756
      %786 = vmatprep.subr.mxu0 %v760
      %787 = vmatpush1.msra.mxu0 %v759
      %788 = vmatprep.subr.mxu0 %v763
      %789 = vmatpush1.msra.mxu0 %v762
      %790 = vmatprep.subr.mxu0 %v766
      %791 = vmatpush1.msra.mxu0 %v765
      %792 = vmatprep.subr.mxu0 %v780
      %793 = vmatpush1.msra.mxu0 %v778
      %794 = vmatprep.subr.mxu0 0.0
      %795 = vmatpush1.msra.mxu0 0.0
      %796 = vmatprep.subr.mxu0 0.0
      %797 = vmatpush1.msra.mxu0 0.0
      %798 = vmatprep.subr.mxu0 0.0
      %799 = vmatpush1.msra.mxu0 0.0
      %800 = vmatprep.subr.mxu0 0.0
      %801 = vmatpush1.msra.mxu0 0.0
      %802 = vmatprep.subr.mxu0 0.0
      %803 = vmatpush1.msra.mxu0 0.0
      %804 = vmatprep.subr.mxu0 0.0
      %805 = vmatpush1.msra.mxu0 0.0
      %806 = vmatprep.subr.mxu0 0.0
      %807 = vmatpush1.msra.mxu0 0.0
      %808 = vmatprep.subr.mxu0 0.0
      %809 = vmatpush1.msra.mxu0 0.0
      %810 = vmatprep.subr.mxu0 0.0
      %811 = vmatpush1.msra.mxu0 0.0
      %812 = vmatprep.subr.mxu0 0.0
      %813 = vmatpush1.msra.mxu0 0.0
      %814 = vmatprep.subr.mxu0 0.0
      %815 = vmatpush1.msra.mxu0 0.0
      %816 = vmatprep.subr.mxu0 0.0
      %817 = vmatpush1.msra.mxu0 0.0
      %818 = vmatprep.subr.mxu0 0.0
      %819 = vmatpush1.msra.mxu0 0.0
      %820 = vmatprep.subr.mxu0 0.0
      %821 = vmatpush1.msra.mxu0 0.0
      %822 = vmatprep.subr.mxu0 0.0
      %823 = vmatpush1.msra.mxu0 0.0
      %824 = vmatprep.subr.mxu0 0.0
      %825 = vmatpush1.msra.mxu0 0.0
      %826 = vmatprep.subr.mxu0 0.0
      %827 = vmatpush1.msra.mxu0 0.0
      %828 = vmatprep.subr.mxu0 0.0
      %829 = vmatpush1.msra.mxu0 0.0
      %830 = vmatprep.subr.mxu0 0.0
      %831 = vmatpush1.msra.mxu0 0.0
      %832 = vmatprep.subr.mxu0 0.0
      %833 = vmatpush1.msra.mxu0 0.0
      %834 = vmatprep.subr.mxu0 0.0
      %835 = vmatpush1.msra.mxu0 0.0
      %836 = vmatprep.subr.mxu0 0.0
      %837 = vmatpush1.msra.mxu0 0.0
      %838 = vmatprep.subr.mxu0 0.0
      %839 = vmatpush1.msra.mxu0 0.0
      %840 = vmatprep.subr.mxu0 0.0
      %841 = vmatpush1.msra.mxu0 0.0
      %842 = vmatprep.subr.mxu0 0.0
      %843 = vmatpush1.msra.mxu0 0.0
      %844 = vmatprep.subr.mxu0 0.0
      %845 = vmatpush1.msra.mxu0 0.0
      %846 = vmatprep.subr.mxu0 0.0
      %847 = vmatpush1.msra.mxu0 0.0
      %848 = vmatprep.mubr.f32.mxu0 0.0
      %849 = vmatmul.mubr.f32.gmra.mrb[0].mxu0 %v776
      %v850 = vpop.f32.mrb[0].mxu0
      %v851 = vadd.f32 %v773, %v850
      %v852 = vpop.f32.mrb[0].mxu0
      %v853 = vadd.f32 %v773, %v852
      %854 = vdwg.mxu0
      %855 = vmatprep.subr.mxu0 0.0
      %856 = vmatpush1.msra.mxu0 %v758
      %857 = vmatprep.subr.mxu0 0.0
      %858 = vmatpush1.msra.mxu0 %v761
      %859 = vmatprep.subr.mxu0 0.0
      %860 = vmatpush1.msra.mxu0 %v764
      %861 = vmatprep.subr.mxu0 0.0
      %862 = vmatpush1.msra.mxu0 %v767
      %863 = vmatprep.subr.mxu0 0.0
      %864 = vmatpush1.msra.mxu0 %v782
      %865 = vmatprep.subr.mxu0 0.0
      %866 = vmatpush1.msra.mxu0 0.0
      %867 = vmatprep.subr.mxu0 0.0
      %868 = vmatpush1.msra.mxu0 0.0
      %869 = vmatprep.subr.mxu0 0.0
      %870 = vmatpush1.msra.mxu0 0.0
      %871 = vmatprep.subr.mxu0 0.0
      %872 = vmatpush1.msra.mxu0 0.0
      %873 = vmatprep.subr.mxu0 0.0
      %874 = vmatpush1.msra.mxu0 0.0
      %875 = vmatprep.subr.mxu0 0.0
      %876 = vmatpush1.msra.mxu0 0.0
      %877 = vmatprep.subr.mxu0 0.0
      %878 = vmatpush1.msra.mxu0 0.0
      %879 = vmatprep.subr.mxu0 0.0
      %880 = vmatpush1.msra.mxu0 0.0
      %881 = vmatprep.subr.mxu0 0.0
      %882 = vmatpush1.msra.mxu0 0.0
      %883 = vmatprep.subr.mxu0 0.0
      %884 = vmatpush1.msra.mxu0 0.0
      %885 = vmatprep.subr.mxu0 0.0
      %886 = vmatpush1.msra.mxu0 0.0
      %887 = vmatprep.subr.mxu0 0.0
      %888 = vmatpush1.msra.mxu0 0.0
      %889 = vmatprep.subr.mxu0 0.0
      %890 = vmatpush1.msra.mxu0 0.0
      %891 = vmatprep.subr.mxu0 0.0
      %892 = vmatpush1.msra.mxu0 0.0
      %893 = vmatprep.subr.mxu0 0.0
      %894 = vmatpush1.msra.mxu0 0.0
      %895 = vmatprep.subr.mxu0 0.0
      %896 = vmatpush1.msra.mxu0 0.0
      %897 = vmatprep.subr.mxu0 0.0
      %898 = vmatpush1.msra.mxu0 0.0
      %899 = vmatprep.subr.mxu0 0.0
      %900 = vmatpush1.msra.mxu0 0.0
      %901 = vmatprep.subr.mxu0 0.0
      %902 = vmatpush1.msra.mxu0 0.0
      %903 = vmatprep.subr.mxu0 0.0
      %904 = vmatpush1.msra.mxu0 0.0
      %905 = vmatprep.subr.mxu0 0.0
      %906 = vmatpush1.msra.mxu0 0.0
      %907 = vmatprep.subr.mxu0 0.0
      %908 = vmatpush1.msra.mxu0 0.0
      %909 = vmatprep.subr.mxu0 0.0
      %910 = vmatpush1.msra.mxu0 0.0
      %911 = vmatprep.subr.mxu0 0.0
      %912 = vmatpush1.msra.mxu0 0.0
      %913 = vmatprep.subr.mxu0 0.0
      %914 = vmatpush1.msra.mxu0 0.0
      %915 = vmatprep.subr.mxu0 0.0
      %916 = vmatpush1.msra.mxu0 0.0
      %917 = vmatprep.subr.mxu0 0.0
      %918 = vmatpush1.msra.mxu0 0.0
      %919 = vmatprep.mubr.f32.mxu0 0.0
      %920 = vmatmul.mubr.f32.gmra.mrb[0].mxu0 %v776
      %v921 = vpop.f32.mrb[0].mxu0
      %v922 = vadd.f32 %v773, %v921
      %v923 = vpop.f32.mrb[0].mxu0
      %924 = vdwg.mxu0
      %vm925 = vcmp.ge.f32.partialorder %v851, 0.0
      %vm926 = vcmp.ge.f32.partialorder %v853, 0.0
      %vm927 = vcmp.ge.f32.partialorder %v922, 0.0
      %v928 = vmul.f32 %v851, 0.01
      %v929 = vmul.f32 %v853, 0.01
      %v930 = vmul.f32 %v922, 0.01
      %v931 = vsel %vm925, %v851, %v928
      %v932 = vsel %vm926, %v853, %v929
      %v933 = vsel %vm927, %v922, %v930
      %v934 = vmul.f32 %v931, %v608
      %v935 = vmul.f32 %v932, %v612
      %v936 = vmul.f32 %v933, %v616
      %940 = vrot.lane.b32.xlu0 %v934, 19
      %v941 = vpop.permute.xlu0 %940
      %942 = vrot.lane.b32.xlu0 %v935, 19
      %v943 = vpop.permute.xlu0 %942
      %944 = vrot.lane.b32.xlu0 %v936, 19
      %v945 = vpop.permute.xlu0 %944
      %v946 = vsel %vm632, %v941, %v943
      %v947 = vsel %vm632, %v943, %v945
      %v952 = vsel %vm632, 0.0, %v941
      %v953 = vsel %vm632, %v945, 0.0
      %v956 = vrot.slane %v952, 4
      %v957 = vrot.slane %v946, 4
      %v958 = vrot.slane %v947, 4
      %v959 = vrot.slane %v953, 4
      %960 = vrot.lane.b32.xlu0 %v956, 127
      %v961 = vpop.permute.xlu0 %960
      %962 = vrot.lane.b32.xlu0 %v957, 127
      %v963 = vpop.permute.xlu0 %962
      %964 = vrot.lane.b32.xlu0 %v958, 127
      %v965 = vpop.permute.xlu0 %964
      %966 = vrot.lane.b32.xlu0 %v959, 127
      %v967 = vpop.permute.xlu0 %966
      %v968 = vsel %vm323, %v961, %v963
      %v969 = vsel %vm323, %v963, %v965
      %v970 = vsel %vm323, %v965, %v967
      %974 = vrot.lane.b32.xlu0 %v952, 126
      %v975 = vpop.permute.xlu0 %974
      %976 = vrot.lane.b32.xlu0 %v946, 126
      %v977 = vpop.permute.xlu0 %976
      %978 = vrot.lane.b32.xlu0 %v947, 126
      %v979 = vpop.permute.xlu0 %978
      %980 = vrot.lane.b32.xlu0 %v953, 126
      %v981 = vpop.permute.xlu0 %980
      %v982 = vsel %vm339, %v975, %v977
      %v983 = vsel %vm339, %v977, %v979
      %v984 = vsel %vm339, %v979, %v981
      %988 = vrot.lane.b32.xlu0 %v956, 110
      %v989 = vpop.permute.xlu0 %988
      %990 = vrot.lane.b32.xlu0 %v957, 110
      %v991 = vpop.permute.xlu0 %990
      %992 = vrot.lane.b32.xlu0 %v958, 110
      %v993 = vpop.permute.xlu0 %992
      %994 = vrot.lane.b32.xlu0 %v959, 110
      %v995 = vpop.permute.xlu0 %994
      %v996 = vsel %vm354, %v989, %v991
      %v997 = vsel %vm354, %v991, %v993
      %v998 = vsel %vm354, %v993, %v995
      %1002 = vrot.lane.b32.xlu0 %v952, 109
      %v1003 = vpop.permute.xlu0 %1002
      %1004 = vrot.lane.b32.xlu0 %v946, 109
      %v1005 = vpop.permute.xlu0 %1004
      %1006 = vrot.lane.b32.xlu0 %v947, 109
      %v1007 = vpop.permute.xlu0 %1006
      %1008 = vrot.lane.b32.xlu0 %v953, 109
      %v1009 = vpop.permute.xlu0 %1008
      %v1010 = vsel %vm369, %v1003, %v1005
      %v1011 = vsel %vm369, %v1005, %v1007
      %v1012 = vsel %vm369, %v1007, %v1009
      %1016 = vrot.lane.b32.xlu0 %v956, 108
      %v1017 = vpop.permute.xlu0 %1016
      %1018 = vrot.lane.b32.xlu0 %v957, 108
      %v1019 = vpop.permute.xlu0 %1018
      %1020 = vrot.lane.b32.xlu0 %v958, 108
      %v1021 = vpop.permute.xlu0 %1020
      %1022 = vrot.lane.b32.xlu0 %v959, 108
      %v1023 = vpop.permute.xlu0 %1022
      %v1024 = vsel %vm384, %v1017, %v1019
      %v1025 = vsel %vm384, %v1019, %v1021
      %v1026 = vsel %vm384, %v1021, %v1023
      %1030 = vrot.lane.b32.xlu0 %v952, 92
      %v1031 = vpop.permute.xlu0 %1030
      %1032 = vrot.lane.b32.xlu0 %v946, 92
      %v1033 = vpop.permute.xlu0 %1032
      %1034 = vrot.lane.b32.xlu0 %v947, 92
      %v1035 = vpop.permute.xlu0 %1034
      %1036 = vrot.lane.b32.xlu0 %v953, 92
      %v1037 = vpop.permute.xlu0 %1036
      %v1038 = vsel %vm399, %v1031, %v1033
      %v1039 = vsel %vm399, %v1033, %v1035
      %v1040 = vsel %vm399, %v1035, %v1037
      %1044 = vrot.lane.b32.xlu0 %v956, 91
      %v1045 = vpop.permute.xlu0 %1044
      %1046 = vrot.lane.b32.xlu0 %v957, 91
      %v1047 = vpop.permute.xlu0 %1046
      %1048 = vrot.lane.b32.xlu0 %v958, 91
      %v1049 = vpop.permute.xlu0 %1048
      %1050 = vrot.lane.b32.xlu0 %v959, 91
      %v1051 = vpop.permute.xlu0 %1050
      %v1052 = vsel %vm414, %v1045, %v1047
      %v1053 = vsel %vm414, %v1047, %v1049
      %v1054 = vsel %vm414, %v1049, %v1051
      %1058 = vrot.lane.b32.xlu0 %v952, 90
      %v1059 = vpop.permute.xlu0 %1058
      %1060 = vrot.lane.b32.xlu0 %v946, 90
      %v1061 = vpop.permute.xlu0 %1060
      %1062 = vrot.lane.b32.xlu0 %v947, 90
      %v1063 = vpop.permute.xlu0 %1062
      %1064 = vrot.lane.b32.xlu0 %v953, 90
      %v1065 = vpop.permute.xlu0 %1064
      %v1066 = vsel %vm429, %v1059, %v1061
      %v1067 = vsel %vm429, %v1061, %v1063
      %v1068 = vsel %vm429, %v1063, %v1065
      %v1069 = vsel %vm433, %v952, %v968
      %v1070 = vsel %vm433, %v946, %v969
      %v1071 = vsel %vm433, %v947, %v970
      %v1072 = vsel %vm433, %v982, %v996
      %v1073 = vsel %vm433, %v983, %v997
      %v1074 = vsel %vm433, %v984, %v998
      %v1075 = vsel %vm433, %v1010, %v1024
      %v1076 = vsel %vm433, %v1011, %v1025
      %v1077 = vsel %vm433, %v1012, %v1026
      %v1078 = vsel %vm433, %v1038, %v1052
      %v1079 = vsel %vm433, %v1039, %v1053
      %v1080 = vsel %vm433, %v1040, %v1054
      %v1081 = vld [vmem:[%s6] sm:$0xf]
      %v1082 = vld [vmem:[%s7] sm:$0xf]
      %1084 = vset.pattern.permute.xlu0 0
      %1085 = vperm.xlu0 %1084, %v1082
      %v1086 = vpop.permute.xlu0 %1085
      %v1089 = vsel %vm453, %v1081, 0
      %v1091 = vsel %vm433, %v1066, 0
      %v1093 = vsel %vm433, %v1067, 0
      %v1095 = vsel %vm433, %v1068, 0
      %1097 = vmatprep.subr.mxu0 %v1070
      %1098 = vmatpush1.msra.mxu0 %v1069
      %1099 = vmatprep.subr.mxu0 %v1073
      %1100 = vmatpush1.msra.mxu0 %v1072
      %1101 = vmatprep.subr.mxu0 %v1076
      %1102 = vmatpush1.msra.mxu0 %v1075
      %1103 = vmatprep.subr.mxu0 %v1079
      %1104 = vmatpush1.msra.mxu0 %v1078
      %1105 = vmatprep.subr.mxu0 %v1093
      %1106 = vmatpush1.msra.mxu0 %v1091
      %1107 = vmatprep.subr.mxu0 0.0
      %1108 = vmatpush1.msra.mxu0 0.0
      %1109 = vmatprep.subr.mxu0 0.0
      %1110 = vmatpush1.msra.mxu0 0.0
      %1111 = vmatprep.subr.mxu0 0.0
      %1112 = vmatpush1.msra.mxu0 0.0
      %1113 = vmatprep.subr.mxu0 0.0
      %1114 = vmatpush1.msra.mxu0 0.0
      %1115 = vmatprep.subr.mxu0 0.0
      %1116 = vmatpush1.msra.mxu0 0.0
      %1117 = vmatprep.subr.mxu0 0.0
      %1118 = vmatpush1.msra.mxu0 0.0
      %1119 = vmatprep.subr.mxu0 0.0
      %1120 = vmatpush1.msra.mxu0 0.0
      %1121 = vmatprep.subr.mxu0 0.0
      %1122 = vmatpush1.msra.mxu0 0.0
      %1123 = vmatprep.subr.mxu0 0.0
      %1124 = vmatpush1.msra.mxu0 0.0
      %1125 = vmatprep.subr.mxu0 0.0
      %1126 = vmatpush1.msra.mxu0 0.0
      %1127 = vmatprep.subr.mxu0 0.0
      %1128 = vmatpush1.msra.mxu0 0.0
      %1129 = vmatprep.subr.mxu0 0.0
      %1130 = vmatpush1.msra.mxu0 0.0
      %1131 = vmatprep.subr.mxu0 0.0
      %1132 = vmatpush1.msra.mxu0 0.0
      %1133 = vmatprep.subr.mxu0 0.0
      %1134 = vmatpush1.msra.mxu0 0.0
      %1135 = vmatprep.subr.mxu0 0.0
      %1136 = vmatpush1.msra.mxu0 0.0
      %1137 = vmatprep.subr.mxu0 0.0
      %1138 = vmatpush1.msra.mxu0 0.0
      %1139 = vmatprep.subr.mxu0 0.0
      %1140 = vmatpush1.msra.mxu0 0.0
      %1141 = vmatprep.subr.mxu0 0.0
      %1142 = vmatpush1.msra.mxu0 0.0
      %1143 = vmatprep.subr.mxu0 0.0
      %1144 = vmatpush1.msra.mxu0 0.0
      %1145 = vmatprep.subr.mxu0 0.0
      %1146 = vmatpush1.msra.mxu0 0.0
      %1147 = vmatprep.subr.mxu0 0.0
      %1148 = vmatpush1.msra.mxu0 0.0
      %1149 = vmatprep.subr.mxu0 0.0
      %1150 = vmatpush1.msra.mxu0 0.0
      %1151 = vmatprep.subr.mxu0 0.0
      %1152 = vmatpush1.msra.mxu0 0.0
      %1153 = vmatprep.subr.mxu0 0.0
      %1154 = vmatpush1.msra.mxu0 0.0
      %1155 = vmatprep.subr.mxu0 0.0
      %1156 = vmatpush1.msra.mxu0 0.0
      %1157 = vmatprep.subr.mxu0 0.0
      %1158 = vmatpush1.msra.mxu0 0.0
      %1159 = vmatprep.subr.mxu0 0.0
      %1160 = vmatpush1.msra.mxu0 0.0
      %1161 = vmatprep.mubr.f32.mxu0 0.0
      %1162 = vmatmul.mubr.f32.gmra.mrb[0].mxu0 %v1089
      %v1163 = vpop.f32.mrb[0].mxu0
      %v1164 = vadd.f32 %v1086, %v1163
      %v1165 = vpop.f32.mrb[0].mxu0
      %v1166 = vadd.f32 %v1086, %v1165
      %1167 = vdwg.mxu0
      %1168 = vmatprep.subr.mxu0 0.0
      %1169 = vmatpush1.msra.mxu0 %v1071
      %1170 = vmatprep.subr.mxu0 0.0
      %1171 = vmatpush1.msra.mxu0 %v1074
      %1172 = vmatprep.subr.mxu0 0.0
      %1173 = vmatpush1.msra.mxu0 %v1077
      %1174 = vmatprep.subr.mxu0 0.0
      %1175 = vmatpush1.msra.mxu0 %v1080
      %1176 = vmatprep.subr.mxu0 0.0
      %1177 = vmatpush1.msra.mxu0 %v1095
      %1178 = vmatprep.subr.mxu0 0.0
      %1179 = vmatpush1.msra.mxu0 0.0
      %1180 = vmatprep.subr.mxu0 0.0
      %1181 = vmatpush1.msra.mxu0 0.0
      %1182 = vmatprep.subr.mxu0 0.0
      %1183 = vmatpush1.msra.mxu0 0.0
      %1184 = vmatprep.subr.mxu0 0.0
      %1185 = vmatpush1.msra.mxu0 0.0
      %1186 = vmatprep.subr.mxu0 0.0
      %1187 = vmatpush1.msra.mxu0 0.0
      %1188 = vmatprep.subr.mxu0 0.0
      %1189 = vmatpush1.msra.mxu0 0.0
      %1190 = vmatprep.subr.mxu0 0.0
      %1191 = vmatpush1.msra.mxu0 0.0
      %1192 = vmatprep.subr.mxu0 0.0
      %1193 = vmatpush1.msra.mxu0 0.0
      %1194 = vmatprep.subr.mxu0 0.0
      %1195 = vmatpush1.msra.mxu0 0.0
      %1196 = vmatprep.subr.mxu0 0.0
      %1197 = vmatpush1.msra.mxu0 0.0
      %1198 = vmatprep.subr.mxu0 0.0
      %1199 = vmatpush1.msra.mxu0 0.0
      %1200 = vmatprep.subr.mxu0 0.0
      %1201 = vmatpush1.msra.mxu0 0.0
      %1202 = vmatprep.subr.mxu0 0.0
      %1203 = vmatpush1.msra.mxu0 0.0
      %1204 = vmatprep.subr.mxu0 0.0
      %1205 = vmatpush1.msra.mxu0 0.0
      %1206 = vmatprep.subr.mxu0 0.0
      %1207 = vmatpush1.msra.mxu0 0.0
      %1208 = vmatprep.subr.mxu0 0.0
      %1209 = vmatpush1.msra.mxu0 0.0
      %1210 = vmatprep.subr.mxu0 0.0
      %1211 = vmatpush1.msra.mxu0 0.0
      %1212 = vmatprep.subr.mxu0 0.0
      %1213 = vmatpush1.msra.mxu0 0.0
      %1214 = vmatprep.subr.mxu0 0.0
      %1215 = vmatpush1.msra.mxu0 0.0
      %1216 = vmatprep.subr.mxu0 0.0
      %1217 = vmatpush1.msra.mxu0 0.0
      %1218 = vmatprep.subr.mxu0 0.0
      %1219 = vmatpush1.msra.mxu0 0.0
      %1220 = vmatprep.subr.mxu0 0.0
      %1221 = vmatpush1.msra.mxu0 0.0
      %1222 = vmatprep.subr.mxu0 0.0
      %1223 = vmatpush1.msra.mxu0 0.0
      %1224 = vmatprep.subr.mxu0 0.0
      %1225 = vmatpush1.msra.mxu0 0.0
      %1226 = vmatprep.subr.mxu0 0.0
      %1227 = vmatpush1.msra.mxu0 0.0
      %1228 = vmatprep.subr.mxu0 0.0
      %1229 = vmatpush1.msra.mxu0 0.0
      %1230 = vmatprep.subr.mxu0 0.0
      %1231 = vmatpush1.msra.mxu0 0.0
      %1232 = vmatprep.mubr.f32.mxu0 0.0
      %1233 = vmatmul.mubr.f32.gmra.mrb[0].mxu0 %v1089
      %v1234 = vpop.f32.mrb[0].mxu0
      %v1235 = vadd.f32 %v1086, %v1234
      %v1236 = vpop.f32.mrb[0].mxu0
      %1237 = vdwg.mxu0
      %vm1238 = vcmp.ge.f32.partialorder %v1164, 0.0
      %vm1239 = vcmp.ge.f32.partialorder %v1166, 0.0
      %vm1240 = vcmp.ge.f32.partialorder %v1235, 0.0
      %v1241 = vmul.f32 %v1164, 0.01
      %v1242 = vmul.f32 %v1166, 0.01
      %v1243 = vmul.f32 %v1235, 0.01
      %v1244 = vsel %vm1238, %v1164, %v1241
      %v1245 = vsel %vm1239, %v1166, %v1242
      %v1246 = vsel %vm1240, %v1235, %v1243
      %v1250 = vrot.slane %v530, 4
      %v1251 = vrot.slane %v532, 4
      %v1252 = vrot.slane %v601, 4
      %v1256 = vsel %vm433, %v1244, %v1250
      %v1257 = vsel %vm433, %v1245, %v1251
      %v1258 = vsel %vm433, %v1246, %v1252
      %1259 = vst [vmem:[%s305] sm:$0xff] %v1256
      %1260 = vst [vmem:[%s305 + $0x8] sm:$0xff] %v1257
      %1261 = vst [vmem:[%s305 + $0x10] sm:$0xff] %v1258
      %p1262 = scmp.lt.s32.totalorder %s19, 1
      %s1263 = scalar_select %p1262, %s19, 1
      %s1264 = smul.addr %s1263, 3
      %s1265 = smul.addr %s1264, 8
      %s1266 = scalar_lea.vmem %s8, %s1265
      // Predicated region
      $region53: #{deconv_block_forward.1} parent=51 // pred_check
        %p1267 = pneg %p210
      $region54: #{deconv_block_forward.1} parent=51 // pred_check_branch
        %1269 = sbr.rel (%p1267) target = $region56
      $region55: #{deconv_block_forward.1} parent=51 // pred_region
        _
      $region56: #{deconv_block_forward.1} parent=51 // pred_fallthru
        _
    $region52: #{deconv_block_forward.1} parent=5 // pred_fallthru
      _
    %p1270 = scmp.le.s32.totalorder 2, %s14
    // Predicated region
    $region57: #{deconv_block_forward.1} parent=5 // pred_check
      %p1271 = pneg %p1270
    $region58: #{deconv_block_forward.1} parent=5 // pred_check_branch
      %1273 = sbr.rel (%p1271) target = $region60
    $region59: #{deconv_block_forward.1} parent=5 // pred_region
      %s1274 = ssub.s32 %s14, 2
      // Predicated region
      $region61: #{deconv_block_forward.1} parent=59 // pred_check
        %p1275 = pneg %p216
      $region62: #{deconv_block_forward.1} parent=59 // pred_check_branch
        %1277 = sbr.rel (%p1275) target = $region64
      $region63: #{deconv_block_forward.1} parent=59 // pred_region
        %p1278 = scmp.lt.s32.totalorder %s20, 1
        %s1279 = scalar_select %p1278, %s20, 1
        %s1280 = smul.addr %s1279, 3
        %s1281 = smul.addr %s1280, 8
        %s1282 = scalar_lea.vmem %s8, %s1281
      $region64: #{deconv_block_forward.1} parent=59 // pred_fallthru
        _
    $region60: #{deconv_block_forward.1} parent=5 // pred_fallthru
      _
  $region6: #{deconv_block_forward.1} parent=0 // loop_footer
    %s18 = sadd.s32 1, %s14
  $region7: #{deconv_block_forward.1} parent=0 // loop_footer_branch
    %13 = sbr.rel target = $region3
  $region8: #{deconv_block_forward.1} parent=0 // loop_exit
    _

</llo_original>
